<compile_context>
chip_gen: v6e
topology: v6e:2x2x1
jax: 0.10.0
libtpu: 0.0.40
codegen_flags: <defaults>
</compile_context>

<pallas_src>
import functools
import math

import jax
import jax.numpy as jnp
from jax import lax
from jax.experimental import pallas as pl
from jax.experimental.pallas import tpu as pltpu


def _round_up(x, m):
    return ((x + m - 1) // m) * m


def _gelu_tanh(x):
    # tanh approximation of GELU (f32 elementwise, EUP tanh + VPU muls)
    c = 0.7978845608028654  # sqrt(2/pi)
    return 0.5 * x * (1.0 + jnp.tanh(c * (x + 0.044715 * x * x * x)))


# ---------------------------------------------------------------------------
# Fused MLP kernel with Dh-tiled accumulation:
#   for each hidden tile j:
#     h_j = GELU( (bm, Din) @ (Din, bh) + b1_j )        (f32 epilogue)
#     acc += h_j @ (bh, Dout)                           (f32 accumulator)
#   out = acc + b2                                       (at last j)
# ---------------------------------------------------------------------------
def _mlp_kernel(x_ref, w1_ref, b1_ref, w2_ref, b2_ref, o_ref, acc_ref, *,
                compute_dtype):
    j = pl.program_id(1)

    @pl.when(j == 0)
    def _init():
        acc_ref[...] = jnp.zeros_like(acc_ref)

    x = x_ref[...].astype(compute_dtype)                       # (bm, Din)
    h = jnp.dot(x, w1_ref[...],
                preferred_element_type=jnp.float32)            # MXU, f32 acc
    h = _gelu_tanh(h + b1_ref[...])                            # f32 epilogue
    acc_ref[...] += jnp.dot(h.astype(compute_dtype), w2_ref[...],
                            preferred_element_type=jnp.float32)

    @pl.when(j == pl.num_programs(1) - 1)
    def _finalize():
        o_ref[...] = (acc_ref[...] + b2_ref[...]).astype(o_ref.dtype)


def _pick_block_m(M, max_block_m):
    """Multiple-of-8 row tile; avoids large padding fractions."""
    max_block_m = max(8, _round_up(max_block_m, 8))
    if M <= max_block_m:
        return _round_up(M, 8)          # single tile, <=7 padded rows
    for bm in (max_block_m, 512, 256, 128, 64, 32, 16, 8):
        if bm > max_block_m:
            continue
        pad = _round_up(M, bm) - M
        if pad * 10 <= M:               # <=10% padding
            return bm
    return 8


def _pick_block_h(Dh, max_block_h):
    """Hidden tile: multiple of 128 dividing Dh (or whole Dh)."""
    if Dh <= max_block_h or Dh % 128 != 0:
        return Dh
    bh = (max_block_h // 128) * 128
    while bh >= 128:
        if Dh % bh == 0:
            return bh
        bh -= 128
    return Dh


def _vmem_estimate(bm, Din, bh, Dout, x_bytes, w_bytes, out_bytes):
    b = 0
    b += 2 * bm * Din * x_bytes        # x (double-buffered)
    b += 2 * Din * bh * w_bytes        # w1 tile
    b += 2 * bh * 4                    # b1 tile (f32)
    b += 2 * bh * Dout * w_bytes       # w2 tile
    b += 2 * Dout * 4                  # b2
    b += 2 * bm * Dout * out_bytes     # out (double-buffered)
    b += bm * Dout * 4                 # f32 accumulator scratch
    b += bm * bh * 4                   # live f32 hidden slab
    return b


def mlp_forward(x, w1, b1, w2, b2, *, block_m=256, block_h=512,
                use_bf16_matmul=True):
    """x: (..., Din); w1: (Din, Dh); b1: (Dh,); w2: (Dh, Dout); b2: (Dout,)."""
    lead = x.shape[:-1]
    Din = x.shape[-1]
    Dh = w1.shape[1]
    Dout = w2.shape[1]

    M = int(math.prod(lead)) if lead else 1
    xf = x.reshape(M, Din)

    bm = _pick_block_m(M, block_m)
    Mp = _round_up(M, bm)
    if Mp != M:
        xf = jnp.pad(xf, ((0, Mp - M), (0, 0)))

    bh = _pick_block_h(Dh, block_h)

    compute_dtype = jnp.bfloat16 if use_bf16_matmul else jnp.float32
    # Only cast when the caller did not already supply compute-dtype weights.
    w1c = w1 if w1.dtype == compute_dtype else w1.astype(compute_dtype)
    w2c = w2 if w2.dtype == compute_dtype else w2.astype(compute_dtype)
    b1r = b1.reshape(1, Dh).astype(jnp.float32)
    b2r = b2.reshape(1, Dout).astype(jnp.float32)

    # Scheduler hint for XLA around the custom call.
    flops = 2 * Mp * Din * Dh + 2 * Mp * Dh * Dout
    bytes_accessed = (xf.size * xf.dtype.itemsize
                      + w1c.size * w1c.dtype.itemsize
                      + w2c.size * w2c.dtype.itemsize
                      + b1r.size * 4 + b2r.size * 4
                      + Mp * Dout * x.dtype.itemsize)
    cost = pl.CostEstimate(flops=flops, transcendentals=Mp * Dh,
                           bytes_accessed=bytes_accessed)

    vmem_needed = _vmem_estimate(bm, Din, bh, Dout,
                                 xf.dtype.itemsize, w1c.dtype.itemsize,
                                 x.dtype.itemsize)
    # Generous headroom, capped at v7x's 64 MiB physical per-core VMEM.
    vmem_limit = int(min(64 * 1024 * 1024,
                         max(2 * vmem_needed, 16 * 1024 * 1024)))

    grid = (Mp // bm, Dh // bh)

    out = pl.pallas_call(
        functools.partial(_mlp_kernel, compute_dtype=compute_dtype),
        out_shape=jax.ShapeDtypeStruct((Mp, Dout), x.dtype),
        grid_spec=pltpu.PrefetchScalarGridSpec(
            num_scalar_prefetch=0,
            grid=grid,
            in_specs=[
                # x row tile: constant across j -> DMA'd once per row tile.
                pl.BlockSpec((bm, Din), lambda i, j: (i, 0)),
                pl.BlockSpec((Din, bh), lambda i, j: (0, j)),   # w1 slab
                pl.BlockSpec((1, bh), lambda i, j: (0, j)),     # b1 slab
                pl.BlockSpec((bh, Dout), lambda i, j: (j, 0)),  # w2 slab
                pl.BlockSpec((1, Dout), lambda i, j: (0, 0)),   # b2
            ],
            # Output block constant across j: accumulator, written at last j.
            out_specs=pl.BlockSpec((bm, Dout), lambda i, j: (i, 0)),
            scratch_shapes=[pltpu.VMEM((bm, Dout), jnp.float32)],
        ),
        compiler_params=pltpu.CompilerParams(
            dimension_semantics=("parallel", "arbitrary"),
            vmem_limit_bytes=vmem_limit),
        cost_estimate=cost,
    )(xf, w1c, b1r, w2c, b2r)

    if Mp != M:
        out = out[:M]
    return out.reshape(lead + (Dout,))


# ---------------------------------------------------------------------------
# Plain-JAX reference (f32, HIGHEST precision) + driver
# ---------------------------------------------------------------------------
def mlp_reference(x, w1, b1, w2, b2):
    hi = lax.Precision.HIGHEST
    h = _gelu_tanh(jnp.dot(x, w1, precision=hi) + b1)
    return jnp.dot(h, w2, precision=hi) + b2


if __name__ == "__main__":
    # Small transformer-style shapes: (batch, seq, in_features); lane-aligned
    # feature dims. Dh=512 with block_h=256 exercises the tiled-accumulation
    # path (two hidden tiles).
    B, S, Din = 2, 16, 128
    Dh = 512            # hidden_features
    Dout = Din          # out_features defaults to in_features

    key = jax.random.PRNGKey(0)
    kx, k1, k2, k3, k4 = jax.random.split(key, 5)
    x = jax.random.normal(kx, (B, S, Din), jnp.float32)

    # PyTorch nn.Linear default init: U(-1/sqrt(fan_in), 1/sqrt(fan_in)).
    bound1 = 1.0 / math.sqrt(Din)
    bound2 = 1.0 / math.sqrt(Dh)
    w1 = jax.random.uniform(k1, (Din, Dh), jnp.float32, -bound1, bound1)
    b1 = jax.random.uniform(k2, (Dh,), jnp.float32, -bound1, bound1)
    w2 = jax.random.uniform(k3, (Dh, Dout), jnp.float32, -bound2, bound2)
    b2 = jax.random.uniform(k4, (Dout,), jnp.float32, -bound2, bound2)

    # Pre-cast weights to the MXU compute dtype ONCE, outside the hot path
    # (no per-call HBM rewrite of the weight matrices inside mlp_forward).
    w1_bf16 = w1.astype(jnp.bfloat16)
    w2_bf16 = w2.astype(jnp.bfloat16)

    out = mlp_forward(x, w1_bf16, b1, w2_bf16, b2, block_m=256, block_h=256)
    out = jax.block_until_ready(out)

    # Reference uses the same (bf16-rounded) parameters in f32 HIGHEST
    # precision, so the comparison isolates MXU bf16-input / f32-accumulation
    # error of the kernel itself.
    ref = mlp_reference(x, w1_bf16.astype(jnp.float32), b1,
                        w2_bf16.astype(jnp.float32), b2)

    assert out.shape == (B, S, Dout), out.shape
    assert bool(jnp.all(jnp.isfinite(out)))
    max_err = float(jnp.max(jnp.abs(out - ref)))
    assert bool(jnp.allclose(out, ref, atol=2e-2, rtol=2e-2)), max_err
    print("KERNEL_OK")
</pallas_src>

<mosaic_0001>
module attributes {stable_mosaic.version = 11 : i64} {
  func.func @_mlp_kernel(%arg0: i32, %arg1: i32, %arg2: memref<32x128xf32, #tpu.memory_space<vmem>>, %arg3: memref<128x256xbf16, #tpu.memory_space<vmem>>, %arg4: memref<1x256xf32, #tpu.memory_space<vmem>>, %arg5: memref<256x128xbf16, #tpu.memory_space<vmem>>, %arg6: memref<1x128xf32, #tpu.memory_space<vmem>>, %arg7: memref<32x128xf32, #tpu.memory_space<vmem>>, %arg8: memref<32x128xf32, #tpu.memory_space<vmem>>) attributes {dimension_semantics = [#tpu.dimension_semantics<parallel>, #tpu.dimension_semantics<arbitrary>], iteration_bounds = array<i64: 1, 2>, scalar_prefetch = 0 : i64, scratch_operands = 1 : i64, tpu.core_type = #tpu.core_type<tc>, window_params = [{transform_indices = @transform_0, window_bounds = array<i64: 32, 128>}, {transform_indices = @transform_1, window_bounds = array<i64: 128, 256>}, {transform_indices = @transform_2, window_bounds = array<i64: 1, 256>}, {transform_indices = @transform_3, window_bounds = array<i64: 256, 128>}, {pipeline_mode = #tpu.pipeline_mode<synchronous>, transform_indices = @transform_4, window_bounds = array<i64: 1, 128>}, {transform_indices = @transform_5, window_bounds = array<i64: 32, 128>}]} {
    %c0_i32 = arith.constant 0 : i32
    %0 = arith.cmpi eq, %arg1, %c0_i32 : i32
    %1 = arith.extui %0 : i1 to i32
    %c0_i32_0 = arith.constant 0 : i32
    %2 = arith.cmpi ne, %1, %c0_i32_0 : i32
    scf.if %2 {
      %cst_18 = arith.constant 0.000000e+00 : f32
      %32 = vector.broadcast %cst_18 : f32 to vector<32x128xf32>
      %c0_19 = arith.constant 0 : index
      %c0_20 = arith.constant 0 : index
      %33 = vector.load %arg8[%c0_19, %c0_20] : memref<32x128xf32, #tpu.memory_space<vmem>>, vector<32x128xf32>
      tpu.vector_store %arg8[%c0_19, %c0_20], %32 {strides = array<i32>} : memref<32x128xf32, #tpu.memory_space<vmem>>, vector<32x128xf32>,
    } else {
    }
    %c0 = arith.constant 0 : index
    %c0_1 = arith.constant 0 : index
    %3 = vector.load %arg2[%c0, %c0_1] : memref<32x128xf32, #tpu.memory_space<vmem>>, vector<32x128xf32>
    %4 = arith.truncf %3 : vector<32x128xf32> to vector<32x128xbf16>
    %c0_2 = arith.constant 0 : index
    %c0_3 = arith.constant 0 : index
    %5 = vector.load %arg3[%c0_2, %c0_3] : memref<128x256xbf16, #tpu.memory_space<vmem>>, vector<128x256xbf16>
    %cst = arith.constant dense<0.000000e+00> : vector<32x256xf32>
    %6 = tpu.matmul %4, %5, %cst {dimension_numbers = #tpu.dot_dimension_numbers<[1], [0], [0], [1], [0, 0, 1, 1], [], []>} : vector<32x128xbf16>, vector<128x256xbf16>, vector<32x256xf32> -> vector<32x256xf32>
    %c0_4 = arith.constant 0 : index
    %c0_5 = arith.constant 0 : index
    %7 = vector.load %arg4[%c0_4, %c0_5] : memref<1x256xf32, #tpu.memory_space<vmem>>, vector<1x256xf32>
    %8 = vector.broadcast %7 : vector<1x256xf32> to vector<32x256xf32>
    %9 = arith.addf %6, %8 : vector<32x256xf32>
    %cst_6 = arith.constant 5.000000e-01 : f32
    %10 = vector.broadcast %cst_6 : f32 to vector<32x256xf32>
    %11 = arith.mulf %10, %9 : vector<32x256xf32>
    %cst_7 = arith.constant 4.471500e-02 : f32
    %12 = vector.broadcast %cst_7 : f32 to vector<32x256xf32>
    %13 = arith.mulf %12, %9 : vector<32x256xf32>
    %14 = arith.mulf %13, %9 : vector<32x256xf32>
    %15 = arith.mulf %14, %9 : vector<32x256xf32>
    %16 = arith.addf %9, %15 : vector<32x256xf32>
    %cst_8 = arith.constant 0.797884583 : f32
    %17 = vector.broadcast %cst_8 : f32 to vector<32x256xf32>
    %18 = arith.mulf %17, %16 : vector<32x256xf32>
    %19 = math.tanh %18 : vector<32x256xf32>
    %cst_9 = arith.constant 1.000000e+00 : f32
    %20 = vector.broadcast %cst_9 : f32 to vector<32x256xf32>
    %21 = arith.addf %20, %19 : vector<32x256xf32>
    %22 = arith.mulf %11, %21 : vector<32x256xf32>
    %c0_10 = arith.constant 0 : index
    %c0_11 = arith.constant 0 : index
    %23 = vector.load %arg8[%c0_10, %c0_11] : memref<32x128xf32, #tpu.memory_space<vmem>>, vector<32x128xf32>
    %24 = arith.truncf %22 : vector<32x256xf32> to vector<32x256xbf16>
    %c0_12 = arith.constant 0 : index
    %c0_13 = arith.constant 0 : index
    %25 = vector.load %arg5[%c0_12, %c0_13] : memref<256x128xbf16, #tpu.memory_space<vmem>>, vector<256x128xbf16>
    %cst_14 = arith.constant dense<0.000000e+00> : vector<32x128xf32>
    %26 = tpu.matmul %24, %25, %cst_14 {dimension_numbers = #tpu.dot_dimension_numbers<[1], [0], [0], [1], [0, 0, 1, 1], [], []>} : vector<32x256xbf16>, vector<256x128xbf16>, vector<32x128xf32> -> vector<32x128xf32>
    %27 = arith.addf %23, %26 : vector<32x128xf32>
    %c0_15 = arith.constant 0 : index
    %c0_16 = arith.constant 0 : index
    %28 = vector.load %arg8[%c0_15, %c0_16] : memref<32x128xf32, #tpu.memory_space<vmem>>, vector<32x128xf32>
    tpu.vector_store %arg8[%c0_15, %c0_16], %27 {strides = array<i32>} : memref<32x128xf32, #tpu.memory_space<vmem>>, vector<32x128xf32>,
    %c1_i32 = arith.constant 1 : i32
    %29 = arith.cmpi eq, %arg1, %c1_i32 : i32
    %30 = arith.extui %29 : i1 to i32
    %c0_i32_17 = arith.constant 0 : i32
    %31 = arith.cmpi ne, %30, %c0_i32_17 : i32
    scf.if %31 {
      %c0_18 = arith.constant 0 : index
      %c0_19 = arith.constant 0 : index
      %32 = vector.load %arg8[%c0_18, %c0_19] : memref<32x128xf32, #tpu.memory_space<vmem>>, vector<32x128xf32>
      %c0_20 = arith.constant 0 : index
      %c0_21 = arith.constant 0 : index
      %33 = vector.load %arg6[%c0_20, %c0_21] : memref<1x128xf32, #tpu.memory_space<vmem>>, vector<1x128xf32>
      %34 = vector.broadcast %33 : vector<1x128xf32> to vector<32x128xf32>
      %35 = arith.addf %32, %34 : vector<32x128xf32>
      %c0_22 = arith.constant 0 : index
      %c0_23 = arith.constant 0 : index
      %36 = vector.load %arg7[%c0_22, %c0_23] : memref<32x128xf32, #tpu.memory_space<vmem>>, vector<32x128xf32>
      tpu.vector_store %arg7[%c0_22, %c0_23], %35 {strides = array<i32>} : memref<32x128xf32, #tpu.memory_space<vmem>>, vector<32x128xf32>,
    } else {
    }
    return
  }
  func.func @transform_0(%arg0: i32, %arg1: i32) -> (i32, i32) {
    %c0_i32 = arith.constant 0 : i32
    %c0_i32_0 = arith.constant 0 : i32
    return %arg0, %c0_i32 : i32, i32
  }
  func.func @transform_1(%arg0: i32, %arg1: i32) -> (i32, i32) {
    %c0_i32 = arith.constant 0 : i32
    %c0_i32_0 = arith.constant 0 : i32
    return %c0_i32, %arg1 : i32, i32
  }
  func.func @transform_2(%arg0: i32, %arg1: i32) -> (i32, i32) {
    %c0_i32 = arith.constant 0 : i32
    %c0_i32_0 = arith.constant 0 : i32
    return %c0_i32, %arg1 : i32, i32
  }
  func.func @transform_3(%arg0: i32, %arg1: i32) -> (i32, i32) {
    %c0_i32 = arith.constant 0 : i32
    %c0_i32_0 = arith.constant 0 : i32
    return %arg1, %c0_i32 : i32, i32
  }
  func.func @transform_4(%arg0: i32, %arg1: i32) -> (i32, i32) {
    %c0_i32 = arith.constant 0 : i32
    %c0_i32_0 = arith.constant 0 : i32
    %c0_i32_1 = arith.constant 0 : i32
    return %c0_i32, %c0_i32_0 : i32, i32
  }
  func.func @transform_5(%arg0: i32, %arg1: i32) -> (i32, i32) {
    %c0_i32 = arith.constant 0 : i32
    %c0_i32_0 = arith.constant 0 : i32
    return %arg0, %c0_i32 : i32, i32
  }
}

</mosaic_0001>

<llo_original>
// kernel: tpu_custom_call.1
$region0: #{tpu_custom_call.1}
  #allocation0 [shape = 'u32[]', space=smem, size = 0x4, offset = 0x4, fixed_abs, tag = 'smem constant byte address 0x4 - core index']
  #allocation1 [shape = 'u32[144,128]{1,0:T(1,128)}', space=vmem, size = 0x12000, scoped, tag = 'internal scratch']
  #allocation2 [shape = 'f32[32,128]{1,0:T(8,128)}', space=vmem, size = 0x4000, scoped, tag = 'scratch operand']
  %s0 = inlined_call_operand.hbm [shape: f32[32,128], index: 0, kind: input, shape index: {}]
  %s1 = inlined_call_operand.hbm [shape: bf16[128,512], index: 1, kind: input, shape index: {}]
  %s2 = inlined_call_operand.hbm [shape: f32[1,512], index: 2, kind: input, shape index: {}]
  %s3 = inlined_call_operand.hbm [shape: bf16[512,128], index: 3, kind: input, shape index: {}]
  %s4 = inlined_call_operand.vmem [shape: f32[1,128], index: 4, kind: input, shape index: {}]
  %s5 = inlined_call_operand.hbm [shape: f32[32,128], index: 5, kind: output, shape index: {}]
  %s6 = sld [smem:[#allocation0]]
  $region77: #{tpu_custom_call.1} parent=0
    _
  %s8 = ssub.s32 1, %s6
  %s9 = scalar_select 0, %s8, %s6
  $region1: #{tpu_custom_call.1} parent=0
    #allocation3 [shape = 'u8[16384]{0}', space=vmem, size = 0x4000, scoped, tag = 'input window, operand 0, single buffered']
    #allocation4 [shape = 's32[2]{0}', space=sflag, size = 0x8, scoped, tag = 'scoped memory for tpu_custom_call.1']
    #allocation5 [shape = 's32[2]{0}', space=sflag, size = 0x8, scoped, tag = 'scoped memory for tpu_custom_call.1']
    #allocation6 [shape = 'u8[131072]{0}', space=vmem, size = 0x20000, scoped, tag = 'input window, operand 1']
    #allocation7 [shape = 's32[2]{0}', space=sflag, size = 0x8, scoped, tag = 'scoped memory for tpu_custom_call.1']
    #allocation8 [shape = 'u8[2048]{0}', space=vmem, size = 0x800, scoped, tag = 'input window, operand 2']
    #allocation9 [shape = 'u8[131072]{0}', space=vmem, size = 0x20000, scoped, tag = 'input window, operand 3']
    #allocation10 [shape = 's32[2]{0}', space=sflag, size = 0x8, scoped, tag = 'scoped memory for tpu_custom_call.1']
    #allocation11 [shape = 'u8[16384]{0}', space=vmem, size = 0x4000, scoped, tag = 'output window, operand 0, single buffered']
    %10 = vsyncpa [#allocation4], 0
    %11 = vsyncpa [#allocation7], 0
    %s12 = scalar_lea.sflag [#allocation7], 1
    %13 = vsyncpa %s12, 0
    %14 = vsyncpa [#allocation10], 0
    %s15 = scalar_lea.sflag [#allocation10], 1
    %16 = vsyncpa %s15, 0
    %17 = vsyncpa [#allocation5], 0
    loop: start=0, step=1, limit=4
    $region2: #{tpu_custom_call.1} parent=1 // loop_pre_header
      _
    $region3: #{tpu_custom_call.1} parent=1 // loop_header
      %s19 = sphi 0, %s23
      %p20 = scmp.ge.s32.totalorder %s19, 4
      %s26 = sphi 0, %s38
      %s27 = sphi 0, %s34
      %s28 = sphi 0, %s26
      %s29 = sphi 0, %s27
      %s30 = sphi 0, %s28
      %s31 = sphi 0, %s29
      %s41 = sphi 0, %s43
      %s44 = sphi 0, %s41
      %s45 = sphi 0, %s44
      %s61 = sphi 0, %s45
      %s67 = sphi 0, %s69
      %s70 = sphi 0, %s67
      %s71 = sphi 0, %s70
      %s87 = sphi 0, %s71
      %s93 = sphi 0, %s95
      %s96 = sphi 0, %s93
      %s97 = sphi 0, %s96
      %s113 = sphi 0, %s97
      %s119 = sphi 0, %s121
      %s122 = sphi 0, %s119
      %s123 = sphi 0, %s122
      %s139 = sphi 0, %s123
      %s143 = sphi 0, %s143
      %s145 = sphi 0, %s143
      %s146 = sphi 0, %s145
      %s160 = sphi 0, %s146
      %s166 = sphi 0, %s168
      %s169 = sphi 0, %s166
      %s170 = sphi 0, %s169
      %s186 = sphi 0, %s170
    $region4: #{tpu_custom_call.1} parent=1 // loop_header_branch
      %22 = sbr.rel (%p20) target = $region8
    $region5: #{tpu_custom_call.1} parent=1 // loop_body
      %s24 = ssub.s32 %s19, 1
      %s25 = ssub.s32 %s19, 2
      %s32 = sadd.s32 1, %s27
      %p33 = scmp.ge.s32.totalorder %s32, 2
      %s34 = scalar_select %p33, 0, %s32
      %s35 = sadd.s32 1, %s26
      %s36 = scalar_select %p33, %s35, %s26
      %p37 = scmp.ge.s32.totalorder %s36, 1
      %s38 = scalar_select %p37, 0, %s36
      %s39 = ssub.s32 %s26, %s38
      %p40 = scmp.eq.s32.totalorder %s39, 0
      %s42 = sadd.s32 %s41, 1
      %s43 = scalar_select %p40, %s41, %s42
      %p46 = pneg %p40
      %p47 = scmp.eq.s32.totalorder %s19, 1
      %p48 = por %p46, %p47
      %p49 = scmp.ne.s32.totalorder %s41, %s44
      %p50 = scmp.eq.s32.totalorder %s19, 0
      %p51 = por %p49, %p50
      %p52 = scmp.ne.s32.totalorder %s41, %s44
      %p53 = scmp.eq.s32.totalorder %s24, 1
      %p54 = por %p52, %p53
      %p55 = scmp.ne.s32.totalorder %s44, %s45
      %p56 = scmp.eq.s32.totalorder %s24, 0
      %p57 = por %p55, %p56
      %p58 = scmp.ne.s32.totalorder %s44, %s45
      %p59 = scmp.eq.s32.totalorder %s25, 1
      %p60 = por %p58, %p59
      %p62 = scmp.ne.s32.totalorder %s45, %s61
      %p63 = scmp.eq.s32.totalorder %s25, 0
      %p64 = por %p62, %p63
      %s65 = ssub.s32 %s27, %s34
      %p66 = scmp.eq.s32.totalorder %s65, 0
      %s68 = sadd.s32 %s67, 1
      %s69 = scalar_select %p66, %s67, %s68
      %p72 = pneg %p66
      %p73 = scmp.eq.s32.totalorder %s19, 1
      %p74 = por %p72, %p73
      %p75 = scmp.ne.s32.totalorder %s67, %s70
      %p76 = scmp.eq.s32.totalorder %s19, 0
      %p77 = por %p75, %p76
      %p78 = scmp.ne.s32.totalorder %s67, %s70
      %p79 = scmp.eq.s32.totalorder %s24, 1
      %p80 = por %p78, %p79
      %p81 = scmp.ne.s32.totalorder %s70, %s71
      %p82 = scmp.eq.s32.totalorder %s24, 0
      %p83 = por %p81, %p82
      %p84 = scmp.ne.s32.totalorder %s70, %s71
      %p85 = scmp.eq.s32.totalorder %s25, 1
      %p86 = por %p84, %p85
      %p88 = scmp.ne.s32.totalorder %s71, %s87
      %p89 = scmp.eq.s32.totalorder %s25, 0
      %p90 = por %p88, %p89
      %s91 = ssub.s32 %s27, %s34
      %p92 = scmp.eq.s32.totalorder %s91, 0
      %s94 = sadd.s32 %s93, 1
      %s95 = scalar_select %p92, %s93, %s94
      %p98 = pneg %p92
      %p99 = scmp.eq.s32.totalorder %s19, 1
      %p100 = por %p98, %p99
      %p101 = scmp.ne.s32.totalorder %s93, %s96
      %p102 = scmp.eq.s32.totalorder %s19, 0
      %p103 = por %p101, %p102
      %p104 = scmp.ne.s32.totalorder %s93, %s96
      %p105 = scmp.eq.s32.totalorder %s24, 1
      %p106 = por %p104, %p105
      %p107 = scmp.ne.s32.totalorder %s96, %s97
      %p108 = scmp.eq.s32.totalorder %s24, 0
      %p109 = por %p107, %p108
      %p110 = scmp.ne.s32.totalorder %s96, %s97
      %p111 = scmp.eq.s32.totalorder %s25, 1
      %p112 = por %p110, %p111
      %p114 = scmp.ne.s32.totalorder %s97, %s113
      %p115 = scmp.eq.s32.totalorder %s25, 0
      %p116 = por %p114, %p115
      %s117 = ssub.s32 %s27, %s34
      %p118 = scmp.eq.s32.totalorder %s117, 0
      %s120 = sadd.s32 %s119, 1
      %s121 = scalar_select %p118, %s119, %s120
      %p124 = pneg %p118
      %p125 = scmp.eq.s32.totalorder %s19, 1
      %p126 = por %p124, %p125
      %p127 = scmp.ne.s32.totalorder %s119, %s122
      %p128 = scmp.eq.s32.totalorder %s19, 0
      %p129 = por %p127, %p128
      %p130 = scmp.ne.s32.totalorder %s119, %s122
      %p131 = scmp.eq.s32.totalorder %s24, 1
      %p132 = por %p130, %p131
      %p133 = scmp.ne.s32.totalorder %s122, %s123
      %p134 = scmp.eq.s32.totalorder %s24, 0
      %p135 = por %p133, %p134
      %p136 = scmp.ne.s32.totalorder %s122, %s123
      %p137 = scmp.eq.s32.totalorder %s25, 1
      %p138 = por %p136, %p137
      %p140 = scmp.ne.s32.totalorder %s123, %s139
      %p141 = scmp.eq.s32.totalorder %s25, 0
      %p142 = por %p140, %p141
      %s144 = sadd.s32 %s143, 1
      %p147 = scmp.eq.s32.totalorder %s19, 1
      %p148 = scmp.ne.s32.totalorder %s143, %s145
      %p149 = scmp.eq.s32.totalorder %s19, 0
      %p150 = por %p148, %p149
      %p151 = scmp.ne.s32.totalorder %s143, %s145
      %p152 = scmp.eq.s32.totalorder %s24, 1
      %p153 = por %p151, %p152
      %p154 = scmp.ne.s32.totalorder %s145, %s146
      %p155 = scmp.eq.s32.totalorder %s24, 0
      %p156 = por %p154, %p155
      %p157 = scmp.ne.s32.totalorder %s145, %s146
      %p158 = scmp.eq.s32.totalorder %s25, 1
      %p159 = por %p157, %p158
      %p161 = scmp.ne.s32.totalorder %s146, %s160
      %p162 = scmp.eq.s32.totalorder %s25, 0
      %p163 = por %p161, %p162
      %s164 = ssub.s32 %s26, %s38
      %p165 = scmp.eq.s32.totalorder %s164, 0
      %s167 = sadd.s32 %s166, 1
      %s168 = scalar_select %p165, %s166, %s167
      %p171 = pneg %p165
      %p172 = scmp.eq.s32.totalorder %s19, 1
      %p173 = por %p171, %p172
      %p174 = scmp.ne.s32.totalorder %s166, %s169
      %p175 = scmp.eq.s32.totalorder %s19, 0
      %p176 = por %p174, %p175
      %p177 = scmp.ne.s32.totalorder %s166, %s169
      %p178 = scmp.eq.s32.totalorder %s24, 1
      %p179 = por %p177, %p178
      %p180 = scmp.ne.s32.totalorder %s169, %s170
      %p181 = scmp.eq.s32.totalorder %s24, 0
      %p182 = por %p180, %p181
      %p183 = scmp.ne.s32.totalorder %s169, %s170
      %p184 = scmp.eq.s32.totalorder %s25, 1
      %p185 = por %p183, %p184
      %p187 = scmp.ne.s32.totalorder %s170, %s186
      %p188 = scmp.eq.s32.totalorder %s25, 0
      %p189 = por %p187, %p188
      %p190 = scmp.le.s32.totalorder 1, %s19
      %p191 = scmp.lt.s32.totalorder %s19, 3
      %p192 = pnand %p190, %p191
      %p193 = pneg %p192
      // Predicated region
      $region9: #{tpu_custom_call.1} parent=5 // pred_check
        _
      $region10: #{tpu_custom_call.1} parent=5 // pred_check_branch
        %195 = sbr.rel (%p192) target = $region12
      $region11: #{tpu_custom_call.1} parent=5 // pred_region
        %s196 = ssub.s32 %s19, 1
        // Predicated region
        $region13: #{tpu_custom_call.1} parent=11 // pred_check
          %p197 = pneg %p57
        $region14: #{tpu_custom_call.1} parent=11 // pred_check_branch
          %199 = sbr.rel (%p197) target = $region16
        $region15: #{tpu_custom_call.1} parent=11 // pred_region
          %s200 = smul.u32 4, %s28
          %s202 = ssub.s32 512, 512
          %203 = vsyncadd [#allocation4], %s202
          %s204 = smul.addr %s200, 128
          %s205 = scalar_lea.hbm %s0, %s204
          %s206 = sshll.u32 [#allocation3], 4
          %s207 = int_to_ptr.vmem [resolvable:$true] %s206
          %212 = dma.hbm_to_vmem [thread:$0]  %s205, 512, %s207, [#allocation4], 128, 128, 8
        $region16: #{tpu_custom_call.1} parent=11 // pred_fallthru
          _
        // Predicated region
        $region17: #{tpu_custom_call.1} parent=11 // pred_check
          %p213 = pneg %p156
        $region18: #{tpu_custom_call.1} parent=11 // pred_check_branch
          %215 = sbr.rel (%p213) target = $region20
        $region19: #{tpu_custom_call.1} parent=11 // pred_region
          _
        $region20: #{tpu_custom_call.1} parent=11 // pred_fallthru
          _
      $region12: #{tpu_custom_call.1} parent=5 // pred_fallthru
        _
      %p216 = scmp.lt.s32.totalorder %s19, 2
      // Predicated region
      $region21: #{tpu_custom_call.1} parent=5 // pred_check
        %p217 = pneg %p216
      $region22: #{tpu_custom_call.1} parent=5 // pred_check_branch
        %219 = sbr.rel (%p217) target = $region24
      $region23: #{tpu_custom_call.1} parent=5 // pred_region
        // Predicated region
        $region25: #{tpu_custom_call.1} parent=23 // pred_check
          %p220 = pneg %p77
        $region26: #{tpu_custom_call.1} parent=23 // pred_check_branch
          %222 = sbr.rel (%p220) target = $region28
        $region27: #{tpu_custom_call.1} parent=23 // pred_region
          %s223 = sand.u32 %s19, 1
          %s224 = scalar_lea.sflag [#allocation7], %s223
          %s225 = sand.u32 %s67, 1
          %s226 = smul.addr %s225, 128
          %s227 = scalar_lea.vmem [#allocation6], %s226
          %s228 = smul.u32 2, %s27
          %s230 = ssub.s32 2048, 2048
          %231 = vsyncadd %s224, %s230
          %s232 = smul.addr %s228, 64
          %s233 = scalar_lea.hbm %s1, %s232
          %s234 = sshll.u32 %s227, 4
          %s235 = int_to_ptr.vmem [resolvable:$true] %s234
          %240 = dma.hbm_to_vmem [thread:$0]  %s233, 2048, %s235, %s224, 256, 128, 8
        $region28: #{tpu_custom_call.1} parent=23 // pred_fallthru
          _
        // Predicated region
        $region29: #{tpu_custom_call.1} parent=23 // pred_check
          %p241 = pneg %p103
        $region30: #{tpu_custom_call.1} parent=23 // pred_check_branch
          %243 = sbr.rel (%p241) target = $region32
        $region31: #{tpu_custom_call.1} parent=23 // pred_region
          %s244 = sand.u32 %s19, 1
          %s245 = scalar_lea.sflag [#allocation7], %s244
          %s246 = sand.u32 %s93, 1
          %s247 = smul.addr %s246, 2
          %s248 = scalar_lea.vmem [#allocation8], %s247
          %s249 = smul.u32 2, %s27
          %s251 = ssub.s32 32, 32
          %252 = vsyncadd %s245, %s251
          %s253 = smul.addr %s249, 16
          %s254 = scalar_lea.hbm %s2, %s253
          %s256 = sshll.u32 %s248, 4
          %s257 = int_to_ptr.vmem [resolvable:$true] %s256
          %259 = dma.hbm_to_vmem [thread:$0]  %s254, 32, %s257, %s245
        $region32: #{tpu_custom_call.1} parent=23 // pred_fallthru
          _
        // Predicated region
        $region33: #{tpu_custom_call.1} parent=23 // pred_check
          %p260 = pneg %p129
        $region34: #{tpu_custom_call.1} parent=23 // pred_check_branch
          %262 = sbr.rel (%p260) target = $region36
        $region35: #{tpu_custom_call.1} parent=23 // pred_region
          %s263 = sand.u32 %s119, 1
          %s264 = scalar_lea.sflag [#allocation10], %s263
          %s265 = sand.u32 %s119, 1
          %s266 = smul.addr %s265, 128
          %s267 = scalar_lea.vmem [#allocation9], %s266
          %s268 = smul.u32 32, %s27
          %s270 = ssub.s32 2048, 2048
          %271 = vsyncadd %s264, %s270
          %s272 = smul.addr %s268, 64
          %s273 = scalar_lea.hbm %s3, %s272
          %s274 = sshll.u32 %s267, 4
          %s275 = int_to_ptr.vmem [resolvable:$true] %s274
          %280 = dma.hbm_to_vmem [thread:$0]  %s273, 2048, %s275, %s264, 64, 64, 4
        $region36: #{tpu_custom_call.1} parent=23 // pred_fallthru
          _
      $region24: #{tpu_custom_call.1} parent=5 // pred_fallthru
        _
      %p281 = scmp.le.s32.totalorder 1, %s19
      %p282 = scmp.lt.s32.totalorder %s19, 3
      %p283 = pnand %p281, %p282
      %p284 = pneg %p283
      // Predicated region
      $region37: #{tpu_custom_call.1} parent=5 // pred_check
        _
      $region38: #{tpu_custom_call.1} parent=5 // pred_check_branch
        %286 = sbr.rel (%p283) target = $region40
      $region39: #{tpu_custom_call.1} parent=5 // pred_region
        %s287 = ssub.s32 %s19, 1
        // Predicated region
        $region41: #{tpu_custom_call.1} parent=39 // pred_check
          %p288 = pneg %p57
        $region42: #{tpu_custom_call.1} parent=39 // pred_check_branch
          %290 = sbr.rel (%p288) target = $region44
        $region43: #{tpu_custom_call.1} parent=39 // pred_region
          %291 = dma.done [#allocation4], 512
        $region44: #{tpu_custom_call.1} parent=39 // pred_fallthru
          _
        %s292 = sand.u32 %s24, 1
        %s293 = scalar_lea.sflag [#allocation7], %s292
        %s294 = sand.u32 %s70, 1
        %s295 = smul.addr %s294, 128
        %s296 = scalar_lea.vmem [#allocation6], %s295
        // Predicated region
        $region45: #{tpu_custom_call.1} parent=39 // pred_check
          %p297 = pneg %p83
        $region46: #{tpu_custom_call.1} parent=39 // pred_check_branch
          %299 = sbr.rel (%p297) target = $region48
        $region47: #{tpu_custom_call.1} parent=39 // pred_region
          %300 = dma.done %s293, 2048
        $region48: #{tpu_custom_call.1} parent=39 // pred_fallthru
          _
        %s301 = sand.u32 %s24, 1
        %s302 = scalar_lea.sflag [#allocation7], %s301
        %s303 = sand.u32 %s96, 1
        %s304 = smul.addr %s303, 2
        %s305 = scalar_lea.vmem [#allocation8], %s304
        // Predicated region
        $region49: #{tpu_custom_call.1} parent=39 // pred_check
          %p306 = pneg %p109
        $region50: #{tpu_custom_call.1} parent=39 // pred_check_branch
          %308 = sbr.rel (%p306) target = $region52
        $region51: #{tpu_custom_call.1} parent=39 // pred_region
          %309 = dma.done %s302, 32
        $region52: #{tpu_custom_call.1} parent=39 // pred_fallthru
          _
        %s310 = sand.u32 %s122, 1
        %s311 = scalar_lea.sflag [#allocation10], %s310
        %s312 = sand.u32 %s122, 1
        %s313 = smul.addr %s312, 128
        %s314 = scalar_lea.vmem [#allocation9], %s313
        // Predicated region
        $region53: #{tpu_custom_call.1} parent=39 // pred_check
          %p315 = pneg %p135
        $region54: #{tpu_custom_call.1} parent=39 // pred_check_branch
          %317 = sbr.rel (%p315) target = $region56
        $region55: #{tpu_custom_call.1} parent=39 // pred_region
          %318 = dma.done %s311, 2048
        $region56: #{tpu_custom_call.1} parent=39 // pred_fallthru
          _
        %p319 = pneg %p57
        %p320 = pneg %p54
        %s321 = sand.u32 %s24, 1
        %s322 = scalar_lea.sflag [#allocation7], %s321
        %s323 = sand.u32 %s70, 1
        %s324 = smul.addr %s323, 128
        %s325 = scalar_lea.vmem [#allocation6], %s324
        %p326 = pneg %p83
        %p327 = pneg %p80
        %s328 = sand.u32 %s24, 1
        %s329 = scalar_lea.sflag [#allocation7], %s328
        %s330 = sand.u32 %s96, 1
        %s331 = smul.addr %s330, 2
        %s332 = scalar_lea.vmem [#allocation8], %s331
        %p333 = pneg %p109
        %p334 = pneg %p106
        %s335 = sand.u32 %s122, 1
        %s336 = scalar_lea.sflag [#allocation10], %s335
        %s337 = sand.u32 %s122, 1
        %s338 = smul.addr %s337, 128
        %s339 = scalar_lea.vmem [#allocation9], %s338
        %p340 = pneg %p135
        %p341 = pneg %p132
        %p342 = pneg %p156
        %p343 = pneg %p153
        %p344 = pneg %p182
        %p345 = pneg %p179
        %s346 = smul.u32 4, %s28
        %s347 = smul.u32 2, %s29
        %s348 = smul.u32 2, %s29
        %s349 = smul.u32 32, %s29
        %s350 = smul.u32 4, %s28
        %p352 = scmp.eq.s32.totalorder %s29, 0
        // Predicated region
        $region57: #{tpu_custom_call.1} parent=39 // pred_check
          %p353 = pneg %p352
        $region58: #{tpu_custom_call.1} parent=39 // pred_check_branch
          %355 = sbr.rel (%p353) target = $region60
        $region59: #{tpu_custom_call.1} parent=39 // pred_region
          %356 = vst [vmem:[#allocation2] sm:$0xff] 0.0
          %357 = vst [vmem:[#allocation2 + $0x8] sm:$0xff] 0.0
          %358 = vst [vmem:[#allocation2 + $0x10] sm:$0xff] 0.0
          %359 = vst [vmem:[#allocation2 + $0x18] sm:$0xff] 0.0
        $region60: #{tpu_custom_call.1} parent=39 // pred_fallthru
          _
        %v360 = vld [vmem:[#allocation3] sm:$0xff]
        %v361 = vld [vmem:[#allocation3 + $0x8] sm:$0xff]
        %v362 = vld [vmem:[#allocation3 + $0x10] sm:$0xff]
        %v363 = vld [vmem:[#allocation3 + $0x18] sm:$0xff]
        %v364 = vpack.c.bf16 %v361, %v360
        %v365 = vpack.c.bf16 %v363, %v362
        %v366 = vld [vmem:[%s296] sm:$0xff]
        %v367 = vld [vmem:[%s296 + $0x8] sm:$0xff]
        %v368 = vld [vmem:[%s296 + $0x10] sm:$0xff]
        %v369 = vld [vmem:[%s296 + $0x18] sm:$0xff]
        %v370 = vld [vmem:[%s296 + $0x20] sm:$0xff]
        %v371 = vld [vmem:[%s296 + $0x28] sm:$0xff]
        %v372 = vld [vmem:[%s296 + $0x30] sm:$0xff]
        %v373 = vld [vmem:[%s296 + $0x38] sm:$0xff]
        %v374 = vld [vmem:[%s296 + $0x40] sm:$0xff]
        %v375 = vld [vmem:[%s296 + $0x48] sm:$0xff]
        %v376 = vld [vmem:[%s296 + $0x50] sm:$0xff]
        %v377 = vld [vmem:[%s296 + $0x58] sm:$0xff]
        %v378 = vld [vmem:[%s296 + $0x60] sm:$0xff]
        %v379 = vld [vmem:[%s296 + $0x68] sm:$0xff]
        %v380 = vld [vmem:[%s296 + $0x70] sm:$0xff]
        %v381 = vld [vmem:[%s296 + $0x78] sm:$0xff]
        %v382 = vld [vmem:[%s305] sm:$0x3]
        %v384 = vlaneseq
        %v385 = vshrl.u32 %v384, 7
        %v386 = vsub.s32 0, %v385
        %v387 = vrot.slane %v382, %v386
        %v388 = vlaneseq
        %v389 = vshrl.u32 %v388, 7
        %v390 = vsub.s32 1, %v389
        %v391 = vrot.slane %v382, %v390
        %v410 = vunpack.c.l.b16 %v366
        %v411 = vunpack.c.h.b16 %v366
        %v412 = vunpack.c.l.b16 %v367
        %v413 = vunpack.c.h.b16 %v367
        %v414 = vunpack.c.l.b16 %v368
        %v415 = vunpack.c.h.b16 %v368
        %v416 = vunpack.c.l.b16 %v369
        %v417 = vunpack.c.h.b16 %v369
        %v418 = vunpack.c.l.b16 %v370
        %v419 = vunpack.c.h.b16 %v370
        %v420 = vunpack.c.l.b16 %v371
        %v421 = vunpack.c.h.b16 %v371
        %v422 = vunpack.c.l.b16 %v372
        %v423 = vunpack.c.h.b16 %v372
        %v424 = vunpack.c.l.b16 %v373
        %v425 = vunpack.c.h.b16 %v373
        %v426 = vunpack.c.l.b16 %v374
        %v427 = vunpack.c.h.b16 %v374
        %v428 = vunpack.c.l.b16 %v375
        %v429 = vunpack.c.h.b16 %v375
        %v430 = vunpack.c.l.b16 %v376
        %v431 = vunpack.c.h.b16 %v376
        %v432 = vunpack.c.l.b16 %v377
        %v433 = vunpack.c.h.b16 %v377
        %v434 = vunpack.c.l.b16 %v378
        %v435 = vunpack.c.h.b16 %v378
        %v436 = vunpack.c.l.b16 %v379
        %v437 = vunpack.c.h.b16 %v379
        %v438 = vunpack.c.l.b16 %v380
        %v439 = vunpack.c.h.b16 %v380
        %v440 = vunpack.c.l.b16 %v381
        %v441 = vunpack.c.h.b16 %v381
        %v442 = vpack.c.b16 %v412, %v410
        %v443 = vpack.c.b16 %v413, %v411
        %v444 = vpack.c.b16 %v416, %v414
        %v445 = vpack.c.b16 %v417, %v415
        %v446 = vpack.c.b16 %v420, %v418
        %v447 = vpack.c.b16 %v421, %v419
        %v448 = vpack.c.b16 %v424, %v422
        %v449 = vpack.c.b16 %v425, %v423
        %v450 = vpack.c.b16 %v428, %v426
        %v451 = vpack.c.b16 %v429, %v427
        %v452 = vpack.c.b16 %v432, %v430
        %v453 = vpack.c.b16 %v433, %v431
        %v454 = vpack.c.b16 %v436, %v434
        %v455 = vpack.c.b16 %v437, %v435
        %v456 = vpack.c.b16 %v440, %v438
        %v457 = vpack.c.b16 %v441, %v439
        %474 = vmatprep.subr.bf16.mxu0 %v457
        %475 = vmatpush1.bf16.msra.mxu0 %v456
        %476 = vmatprep.subr.bf16.mxu0 %v455
        %477 = vmatpush1.bf16.msra.mxu0 %v454
        %478 = vmatprep.subr.bf16.mxu0 %v453
        %479 = vmatpush1.bf16.msra.mxu0 %v452
        %480 = vmatprep.subr.bf16.mxu0 %v451
        %481 = vmatpush1.bf16.msra.mxu0 %v450
        %482 = vmatprep.subr.bf16.mxu0 %v449
        %483 = vmatpush1.bf16.msra.mxu0 %v448
        %484 = vmatprep.subr.bf16.mxu0 %v447
        %485 = vmatpush1.bf16.msra.mxu0 %v446
        %486 = vmatprep.subr.bf16.mxu0 %v445
        %487 = vmatpush1.bf16.msra.mxu0 %v444
        %488 = vmatprep.subr.bf16.mxu0 %v443
        %489 = vmatpush1.bf16.msra.mxu0 %v442
        %490 = vmatprep.subr.bf16.mxu0 0
        %491 = vmatpush2.bf16.msra.mxu0 0
        %492 = vmatprep.subr.bf16.mxu0 0
        %493 = vmatpush2.bf16.msra.mxu0 0
        %494 = vmatprep.subr.bf16.mxu0 0
        %495 = vmatpush2.bf16.msra.mxu0 0
        %496 = vmatprep.subr.bf16.mxu0 0
        %497 = vmatpush2.bf16.msra.mxu0 0
        %498 = vmatprep.subr.bf16.mxu0 0
        %499 = vmatpush2.bf16.msra.mxu0 0
        %500 = vmatprep.subr.bf16.mxu0 0
        %501 = vmatpush2.bf16.msra.mxu0 0
        %502 = vmatprep.subr.bf16.mxu0 0
        %503 = vmatpush2.bf16.msra.mxu0 0
        %504 = vmatprep.subr.bf16.mxu0 0
        %505 = vmatpush2.bf16.msra.mxu0 0
        %506 = vmatprep.mubr.bf16.mxu0 0
        %507 = vmatmul.mubr.bf16.gmra.mxu0 %v364
        %v508 = vpop.f32.mrf.mxu0
        %v509 = vadd.f32 %v387, %v508
        %v510 = vpop.f32.mrf.mxu0
        %v511 = vadd.f32 %v391, %v510
        %v512 = vpop.f32.mrf.mxu0
        %v513 = vadd.f32 %v387, %v512
        %v514 = vpop.f32.mrf.mxu0
        %v515 = vadd.f32 %v391, %v514
        %516 = vmatprep.mubr.bf16.mxu0 0
        %517 = vmatmul.mubr.bf16.gmra.mxu0 %v365
        %v518 = vpop.f32.mrf.mxu0
        %v519 = vadd.f32 %v387, %v518
        %v520 = vpop.f32.mrf.mxu0
        %v521 = vadd.f32 %v391, %v520
        %v522 = vpop.f32.mrf.mxu0
        %v523 = vadd.f32 %v387, %v522
        %v524 = vpop.f32.mrf.mxu0
        %v525 = vadd.f32 %v391, %v524
        %526 = vdwg.mxu0
        %v527 = vmul.f32 %v509, 0.5
        %v528 = vmul.f32 %v511, 0.5
        %v529 = vmul.f32 %v513, 0.5
        %v530 = vmul.f32 %v515, 0.5
        %v531 = vmul.f32 %v519, 0.5
        %v532 = vmul.f32 %v521, 0.5
        %v533 = vmul.f32 %v523, 0.5
        %v534 = vmul.f32 %v525, 0.5
        %v535 = vmul.f32 %v509, 0.044715
        %v536 = vmul.f32 %v511, 0.044715
        %v537 = vmul.f32 %v513, 0.044715
        %v538 = vmul.f32 %v515, 0.044715
        %v539 = vmul.f32 %v519, 0.044715
        %v540 = vmul.f32 %v521, 0.044715
        %v541 = vmul.f32 %v523, 0.044715
        %v542 = vmul.f32 %v525, 0.044715
        %v543 = vmul.f32 %v535, %v509
        %v544 = vmul.f32 %v536, %v511
        %v545 = vmul.f32 %v537, %v513
        %v546 = vmul.f32 %v538, %v515
        %v547 = vmul.f32 %v539, %v519
        %v548 = vmul.f32 %v540, %v521
        %v549 = vmul.f32 %v541, %v523
        %v550 = vmul.f32 %v542, %v525
        %v551 = vmul.f32 %v543, %v509
        %v552 = vmul.f32 %v544, %v511
        %v553 = vmul.f32 %v545, %v513
        %v554 = vmul.f32 %v546, %v515
        %v555 = vmul.f32 %v547, %v519
        %v556 = vmul.f32 %v548, %v521
        %v557 = vmul.f32 %v549, %v523
        %v558 = vmul.f32 %v550, %v525
        %v559 = vadd.f32 %v509, %v551
        %v560 = vadd.f32 %v511, %v552
        %v561 = vadd.f32 %v513, %v553
        %v562 = vadd.f32 %v515, %v554
        %v563 = vadd.f32 %v519, %v555
        %v564 = vadd.f32 %v521, %v556
        %v565 = vadd.f32 %v523, %v557
        %v566 = vadd.f32 %v525, %v558
        %v567 = vmul.f32 %v559, 0.7978846
        %v568 = vmul.f32 %v560, 0.7978846
        %v569 = vmul.f32 %v561, 0.7978846
        %v570 = vmul.f32 %v562, 0.7978846
        %v571 = vmul.f32 %v563, 0.7978846
        %v572 = vmul.f32 %v564, 0.7978846
        %v573 = vmul.f32 %v565, 0.7978846
        %v574 = vmul.f32 %v566, 0.7978846
        %v575 = vtanh.pop %v567
        %v576 = vtanh.pop %v568
        %v577 = vtanh.pop %v569
        %v578 = vtanh.pop %v570
        %v579 = vtanh.pop %v571
        %v580 = vtanh.pop %v572
        %v581 = vtanh.pop %v573
        %v582 = vtanh.pop %v574
        %v583 = vadd.f32 %v575, 1.0
        %v584 = vadd.f32 %v576, 1.0
        %v585 = vadd.f32 %v577, 1.0
        %v586 = vadd.f32 %v578, 1.0
        %v587 = vadd.f32 %v579, 1.0
        %v588 = vadd.f32 %v580, 1.0
        %v589 = vadd.f32 %v581, 1.0
        %v590 = vadd.f32 %v582, 1.0
        %v591 = vmul.f32 %v527, %v583
        %v592 = vmul.f32 %v528, %v584
        %v593 = vmul.f32 %v529, %v585
        %v594 = vmul.f32 %v530, %v586
        %v595 = vmul.f32 %v531, %v587
        %v596 = vmul.f32 %v532, %v588
        %v597 = vmul.f32 %v533, %v589
        %v598 = vmul.f32 %v534, %v590
        %v599 = vld [vmem:[#allocation2] sm:$0xff]
        %v600 = vld [vmem:[#allocation2 + $0x8] sm:$0xff]
        %v601 = vld [vmem:[#allocation2 + $0x10] sm:$0xff]
        %v602 = vld [vmem:[#allocation2 + $0x18] sm:$0xff]
        %v603 = vpack.c.bf16 %v593, %v591
        %v604 = vpack.c.bf16 %v594, %v592
        %v605 = vpack.c.bf16 %v597, %v595
        %v606 = vpack.c.bf16 %v598, %v596
        %v607 = vld [vmem:[%s314] sm:$0xf]
        %v608 = vld [vmem:[%s314 + $0x4] sm:$0xf]
        %v609 = vld [vmem:[%s314 + $0x8] sm:$0xf]
        %v610 = vld [vmem:[%s314 + $0xc] sm:$0xf]
        %v611 = vld [vmem:[%s314 + $0x10] sm:$0xf]
        %v612 = vld [vmem:[%s314 + $0x14] sm:$0xf]
        %v613 = vld [vmem:[%s314 + $0x18] sm:$0xf]
        %v614 = vld [vmem:[%s314 + $0x1c] sm:$0xf]
        %v615 = vld [vmem:[%s314 + $0x20] sm:$0xf]
        %v616 = vld [vmem:[%s314 + $0x24] sm:$0xf]
        %v617 = vld [vmem:[%s314 + $0x28] sm:$0xf]
        %v618 = vld [vmem:[%s314 + $0x2c] sm:$0xf]
        %v619 = vld [vmem:[%s314 + $0x30] sm:$0xf]
        %v620 = vld [vmem:[%s314 + $0x34] sm:$0xf]
        %v621 = vld [vmem:[%s314 + $0x38] sm:$0xf]
        %v622 = vld [vmem:[%s314 + $0x3c] sm:$0xf]
        %v623 = vld [vmem:[%s314 + $0x40] sm:$0xf]
        %v624 = vld [vmem:[%s314 + $0x44] sm:$0xf]
        %v625 = vld [vmem:[%s314 + $0x48] sm:$0xf]
        %v626 = vld [vmem:[%s314 + $0x4c] sm:$0xf]
        %v627 = vld [vmem:[%s314 + $0x50] sm:$0xf]
        %v628 = vld [vmem:[%s314 + $0x54] sm:$0xf]
        %v629 = vld [vmem:[%s314 + $0x58] sm:$0xf]
        %v630 = vld [vmem:[%s314 + $0x5c] sm:$0xf]
        %v631 = vld [vmem:[%s314 + $0x60] sm:$0xf]
        %v632 = vld [vmem:[%s314 + $0x64] sm:$0xf]
        %v633 = vld [vmem:[%s314 + $0x68] sm:$0xf]
        %v634 = vld [vmem:[%s314 + $0x6c] sm:$0xf]
        %v635 = vld [vmem:[%s314 + $0x70] sm:$0xf]
        %v636 = vld [vmem:[%s314 + $0x74] sm:$0xf]
        %v637 = vld [vmem:[%s314 + $0x78] sm:$0xf]
        %v638 = vld [vmem:[%s314 + $0x7c] sm:$0xf]
        %v671 = vunpack.c.l.b16 %v607
        %v672 = vunpack.c.l.b16 %v608
        %v673 = vunpack.c.l.b16 %v609
        %v674 = vunpack.c.l.b16 %v610
        %v675 = vunpack.c.l.b16 %v611
        %v676 = vunpack.c.l.b16 %v612
        %v677 = vunpack.c.l.b16 %v613
        %v678 = vunpack.c.l.b16 %v614
        %v679 = vunpack.c.l.b16 %v615
        %v680 = vunpack.c.l.b16 %v616
        %v681 = vunpack.c.l.b16 %v617
        %v682 = vunpack.c.l.b16 %v618
        %v683 = vunpack.c.l.b16 %v619
        %v684 = vunpack.c.l.b16 %v620
        %v685 = vunpack.c.l.b16 %v621
        %v686 = vunpack.c.l.b16 %v622
        %v687 = vunpack.c.l.b16 %v623
        %v688 = vunpack.c.l.b16 %v624
        %v689 = vunpack.c.l.b16 %v625
        %v690 = vunpack.c.l.b16 %v626
        %v691 = vunpack.c.l.b16 %v627
        %v692 = vunpack.c.l.b16 %v628
        %v693 = vunpack.c.l.b16 %v629
        %v694 = vunpack.c.l.b16 %v630
        %v695 = vunpack.c.l.b16 %v631
        %v696 = vunpack.c.l.b16 %v632
        %v697 = vunpack.c.l.b16 %v633
        %v698 = vunpack.c.l.b16 %v634
        %v699 = vunpack.c.l.b16 %v635
        %v700 = vunpack.c.l.b16 %v636
        %v701 = vunpack.c.l.b16 %v637
        %v702 = vunpack.c.l.b16 %v638
        %v703 = vpack.c.b16 %v672, %v671
        %v704 = vpack.c.b16 %v674, %v673
        %v705 = vpack.c.b16 %v676, %v675
        %v706 = vpack.c.b16 %v678, %v677
        %v707 = vpack.c.b16 %v680, %v679
        %v708 = vpack.c.b16 %v682, %v681
        %v709 = vpack.c.b16 %v684, %v683
        %v710 = vpack.c.b16 %v686, %v685
        %v711 = vpack.c.b16 %v688, %v687
        %v712 = vpack.c.b16 %v690, %v689
        %v713 = vpack.c.b16 %v692, %v691
        %v714 = vpack.c.b16 %v694, %v693
        %v715 = vpack.c.b16 %v696, %v695
        %v716 = vpack.c.b16 %v698, %v697
        %v717 = vpack.c.b16 %v700, %v699
        %v718 = vpack.c.b16 %v702, %v701
        %735 = vmatprep.subr.bf16.mxu0 0
        %736 = vmatpush1.bf16.msra.mxu0 %v710
        %737 = vmatprep.subr.bf16.mxu0 0
        %738 = vmatpush1.bf16.msra.mxu0 %v709
        %739 = vmatprep.subr.bf16.mxu0 0
        %740 = vmatpush1.bf16.msra.mxu0 %v708
        %741 = vmatprep.subr.bf16.mxu0 0
        %742 = vmatpush1.bf16.msra.mxu0 %v707
        %743 = vmatprep.subr.bf16.mxu0 0
        %744 = vmatpush1.bf16.msra.mxu0 %v706
        %745 = vmatprep.subr.bf16.mxu0 0
        %746 = vmatpush1.bf16.msra.mxu0 %v705
        %747 = vmatprep.subr.bf16.mxu0 0
        %748 = vmatpush1.bf16.msra.mxu0 %v704
        %749 = vmatprep.subr.bf16.mxu0 0
        %750 = vmatpush1.bf16.msra.mxu0 %v703
        %751 = vmatprep.subr.bf16.mxu0 0
        %752 = vmatpush2.bf16.msra.mxu0 %v718
        %753 = vmatprep.subr.bf16.mxu0 0
        %754 = vmatpush2.bf16.msra.mxu0 %v717
        %755 = vmatprep.subr.bf16.mxu0 0
        %756 = vmatpush2.bf16.msra.mxu0 %v716
        %757 = vmatprep.subr.bf16.mxu0 0
        %758 = vmatpush2.bf16.msra.mxu0 %v715
        %759 = vmatprep.subr.bf16.mxu0 0
        %760 = vmatpush2.bf16.msra.mxu0 %v714
        %761 = vmatprep.subr.bf16.mxu0 0
        %762 = vmatpush2.bf16.msra.mxu0 %v713
        %763 = vmatprep.subr.bf16.mxu0 0
        %764 = vmatpush2.bf16.msra.mxu0 %v712
        %765 = vmatprep.subr.bf16.mxu0 0
        %766 = vmatpush2.bf16.msra.mxu0 %v711
        %767 = vmatprep.mubr.bf16.mxu0 %v604
        %768 = vmatmul.mubr.bf16.gmra.mxu0 %v603
        %v769 = vpop.f32.mrf.mxu0
        %v770 = vadd.f32 0.0, %v769
        %v771 = vpop.f32.mrf.mxu0
        %v772 = vpop.f32.mrf.mxu0
        %v773 = vadd.f32 0.0, %v772
        %v774 = vpop.f32.mrf.mxu0
        %775 = vmatprep.mubr.bf16.mxu0 %v606
        %776 = vmatmul.mubr.bf16.gmra.mxu0 %v605
        %v777 = vpop.f32.mrf.mxu0
        %v778 = vadd.f32 0.0, %v777
        %v779 = vpop.f32.mrf.mxu0
        %v780 = vpop.f32.mrf.mxu0
        %v781 = vadd.f32 0.0, %v780
        %v782 = vpop.f32.mrf.mxu0
        %783 = vdwg.mxu0
        %v784 = vadd.f32 %v599, %v770
        %v785 = vadd.f32 %v600, %v773
        %v786 = vadd.f32 %v601, %v778
        %v787 = vadd.f32 %v602, %v781
        %788 = vst [vmem:[#allocation2] sm:$0xff] %v784
        %789 = vst [vmem:[#allocation2 + $0x8] sm:$0xff] %v785
        %790 = vst [vmem:[#allocation2 + $0x10] sm:$0xff] %v786
        %791 = vst [vmem:[#allocation2 + $0x18] sm:$0xff] %v787
        %p792 = scmp.eq.s32.totalorder %s29, 1
        // Predicated region
        $region61: #{tpu_custom_call.1} parent=39 // pred_check
          %p793 = pneg %p792
        $region62: #{tpu_custom_call.1} parent=39 // pred_check_branch
          %795 = sbr.rel (%p793) target = $region64
        $region63: #{tpu_custom_call.1} parent=39 // pred_region
          %v796 = vld [vmem:[#allocation2] sm:$0xff]
          %v797 = vld [vmem:[#allocation2 + $0x8] sm:$0xff]
          %v798 = vld [vmem:[#allocation2 + $0x10] sm:$0xff]
          %v799 = vld [vmem:[#allocation2 + $0x18] sm:$0xff]
          %v800 = vld [vmem:[%s4] sm:$0x1]
          %v802 = vlaneseq
          %v803 = vshrl.u32 %v802, 7
          %v804 = vsub.s32 0, %v803
          %v805 = vrot.slane %v800, %v804
          %v807 = vadd.f32 %v796, %v805
          %v808 = vadd.f32 %v797, %v805
          %v809 = vadd.f32 %v798, %v805
          %v810 = vadd.f32 %v799, %v805
          %811 = vst [vmem:[#allocation11] sm:$0xff] %v807
          %812 = vst [vmem:[#allocation11 + $0x8] sm:$0xff] %v808
          %813 = vst [vmem:[#allocation11 + $0x10] sm:$0xff] %v809
          %814 = vst [vmem:[#allocation11 + $0x18] sm:$0xff] %v810
        $region64: #{tpu_custom_call.1} parent=39 // pred_fallthru
          _
        // Predicated region
        $region65: #{tpu_custom_call.1} parent=39 // pred_check
          %p815 = pneg %p179
        $region66: #{tpu_custom_call.1} parent=39 // pred_check_branch
          %817 = sbr.rel (%p815) target = $region68
        $region67: #{tpu_custom_call.1} parent=39 // pred_region
          %s818 = smul.u32 4, %s28
          %s820 = ssub.s32 512, 512
          %821 = vsyncadd [#allocation5], %s820
          %s822 = smul.addr %s818, 128
          %s823 = scalar_lea.hbm %s5, %s822
          %s824 = sshll.u32 [#allocation11], 4
          %s825 = int_to_ptr.vmem [resolvable:$true] %s824
          %830 = dma.vmem_to_hbm [thread:$0]  %s825, 512, %s823, [#allocation5], 128, 128, 8
        $region68: #{tpu_custom_call.1} parent=39 // pred_fallthru
          _
        // Predicated region
        $region69: #{tpu_custom_call.1} parent=39 // pred_check
          %p831 = pneg %p179
        $region70: #{tpu_custom_call.1} parent=39 // pred_check_branch
          %833 = sbr.rel (%p831) target = $region72
        $region71: #{tpu_custom_call.1} parent=39 // pred_region
          %834 = dma.done [#allocation5], 512
        $region72: #{tpu_custom_call.1} parent=39 // pred_fallthru
          _
      $region40: #{tpu_custom_call.1} parent=5 // pred_fallthru
        _
      %p835 = scmp.le.s32.totalorder 2, %s19
      // Predicated region
      $region73: #{tpu_custom_call.1} parent=5 // pred_check
        %p836 = pneg %p835
      $region74: #{tpu_custom_call.1} parent=5 // pred_check_branch
        %838 = sbr.rel (%p836) target = $region76
      $region75: #{tpu_custom_call.1} parent=5 // pred_region
        %s839 = ssub.s32 %s19, 2
      $region76: #{tpu_custom_call.1} parent=5 // pred_fallthru
        _
    $region6: #{tpu_custom_call.1} parent=1 // loop_footer
      %s23 = sadd.s32 1, %s19
    $region7: #{tpu_custom_call.1} parent=1 // loop_footer_branch
      %18 = sbr.rel target = $region3
    $region8: #{tpu_custom_call.1} parent=1 // loop_exit
      _
    %840 = vsyncpa [#allocation4], 1
    %s841 = scalar_lea.sflag [#allocation4], 1
    %842 = vsyncpa %s841, 1
    %843 = vsyncpa [#allocation7], 1
    %s844 = scalar_lea.sflag [#allocation7], 1
    %845 = vsyncpa %s844, 1
    %846 = vsyncpa [#allocation10], 1
    %s847 = scalar_lea.sflag [#allocation10], 1
    %848 = vsyncpa %s847, 1
    %849 = vsyncpa [#allocation5], 1
    %s850 = scalar_lea.sflag [#allocation5], 1
    %851 = vsyncpa %s850, 1

</llo_original>
